<compile_context>
chip_gen: v7x
topology: tpu7x:2x2x1
jax: 0.10.0
libtpu: 0.0.40
codegen_flags: <defaults>
</compile_context>

<pallas_src>
import functools

import jax
import jax.numpy as jnp
from jax.experimental import pallas as pl
from jax.experimental.pallas import tpu as pltpu


def _topk_routing_kernel(q_ref, k_ref, w_ref, idx_ref, *, scale, topk,
                         bf16_matmul):
    # q_ref:   (bB, tq, D)     packed query tile (bB batch elements)
    # k_ref:   (bB, Sk, D)     full key sequence of those batch elements
    # w_ref:   (bB, tq, topk)  routing weights (softmax over top-k logits)
    # idx_ref: (bB, tq, topk)  top-k column indices (int32)
    q = q_ref[...]
    k = k_ref[...]
    if bf16_matmul:
        q = q.astype(jnp.bfloat16)
        k = k.astype(jnp.bfloat16)

    # Unscaled logits on the MXU with f32 accumulation.  The (positive) scale
    # does not change top-k order, so it is applied only to the selected
    # (tq, topk) values inside the softmax below.
    logits = jnp.einsum("bqd,bkd->bqk", q, k,
                        preferred_element_type=jnp.float32)  # (bB, tq, Sk) f32

    sk = logits.shape[-1]
    col_ids = jax.lax.broadcasted_iota(jnp.int32, logits.shape, 2)  # (bB,tq,Sk)

    vals = []
    idxs = []
    work = logits
    # Iterative top-k (topk is small and static): max -> first-occurrence
    # argmax via masked int32 lane-min -> mask out -> repeat.  Matches
    # torch.topk / lax.top_k ordering (descending, ties broken by lower idx).
    for _ in range(topk):
        m = jnp.max(work, axis=-1, keepdims=True)                    # (bB,tq,1)
        is_max = work == m
        idx = jnp.min(jnp.where(is_max, col_ids, jnp.int32(sk)),
                      axis=-1, keepdims=True)                        # (bB,tq,1)
        vals.append(m)
        idxs.append(idx)
        work = jnp.where(col_ids == idx, -jnp.inf, work)

    topv = jnp.concatenate(vals, axis=-1)                            # (bB,tq,K)
    topi = jnp.concatenate(idxs, axis=-1)                            # (bB,tq,K)

    # softmax(scale * topv); vals[0] is already the row max, so this is
    # numerically safe and mathematically identical to scaling the logits.
    p = jnp.exp((topv - vals[0]) * jnp.float32(scale))
    w = p / jnp.sum(p, axis=-1, keepdims=True)

    w_ref[...] = w.astype(w_ref.dtype)
    idx_ref[...] = topi


def _vmem_budget_bytes():
    """Per-generation VMEM planning budget + explicit scoped limit."""
    cap = 128 * 1024 * 1024
    try:
        info = pltpu.get_tpu_info()
        cap = int(getattr(info, "vmem_capacity_bytes", cap) or cap)
    except Exception:
        pass
    # Leave headroom for compiler-internal scratch / pipeline bookkeeping.
    # (v5e/v6e: 128 MiB physical -> ~96 MiB; v7x: 64 MiB physical -> 48 MiB.)
    limit = int(min(cap * 3 // 4, 100 * 1024 * 1024))
    budget = int(limit * 0.85)
    return budget, limit


def _estimate_step_vmem(bB, tq, Sk, D, topk, in_itemsize, out_itemsize):
    # Double-buffered input & output blocks + ~4 live (tq, Sk) 32-bit
    # intermediates (logits, working copy, column iota, mask/temp).
    inputs = 2 * bB * (tq + Sk) * D * in_itemsize
    outputs = 2 * bB * tq * topk * (out_itemsize + 4)
    interm = 4 * bB * tq * Sk * 4
    return inputs + outputs + interm


def _pick_tiles(B, Sq, Sk, D, topk, in_itemsize, out_itemsize, budget):
    # Candidate query tiles: prefer large multiples of 256 (MXU M-dim on
    # v6e/v7x; multiples of 128 cover v5e).  Minimum 16 for packed (bf16)
    # inputs, 8 otherwise.
    min_tq = 8 if in_itemsize >= 4 else 16
    cands = [c for c in (1024, 512, 256, 128, 64, 32, 16, 8)
             if c >= min_tq and Sq % c == 0]
    if not cands:
        cands = [Sq]
    tq = cands[-1]
    for c in cands:
        if _estimate_step_vmem(1, c, Sk, D, topk,
                               in_itemsize, out_itemsize) <= budget:
            tq = c
            break

    # Pack several batch elements per grid step when Sq (and hence tq) is
    # small, to fill the MXU M dimension and amortize per-step overhead —
    # but keep >= 2 grid steps so both TensorCores of a v7x megacore
    # (and the pipeline) have work.
    bB = 1
    target_rows = 256
    while (B % (2 * bB) == 0
           and 2 * bB * tq <= target_rows
           and (B // (2 * bB)) * (Sq // tq) >= 2
           and _estimate_step_vmem(2 * bB, tq, Sk, D, topk,
                                   in_itemsize, out_itemsize) <= budget):
        bB *= 2
    return bB, tq


@functools.partial(jax.jit, static_argnames=("topk", "scale", "bf16_matmul"))
def topk_routing(query, key, *, topk=4, scale=None, bf16_matmul=False):
    """query: (B, Sq, D); key: (B, Sk, D) -> (r_weight (B,Sq,topk), idx (B,Sq,topk))."""
    B, Sq, D = query.shape
    Bk, Sk, Dk = key.shape
    assert Bk == B and Dk == D
    assert topk <= Sk
    if scale is None:
        scale = D ** (-0.5)

    in_itemsize = query.dtype.itemsize
    out_itemsize = query.dtype.itemsize
    budget, vmem_limit = _vmem_budget_bytes()
    bB, tq = _pick_tiles(B, Sq, Sk, D, topk, in_itemsize, out_itemsize, budget)
    grid = (B // bB, Sq // tq)

    kernel = functools.partial(_topk_routing_kernel, scale=scale, topk=topk,
                               bf16_matmul=bf16_matmul)

    cost = pl.CostEstimate(
        flops=2 * B * Sq * Sk * D,
        transcendentals=B * Sq * topk,
        bytes_accessed=(B * Sq * D + B * Sk * D) * in_itemsize
                       + B * Sq * topk * (out_itemsize + 4),
    )

    r_weight, topk_index = pl.pallas_call(
        kernel,
        out_shape=(
            jax.ShapeDtypeStruct((B, Sq, topk), query.dtype),
            jax.ShapeDtypeStruct((B, Sq, topk), jnp.int32),
        ),
        grid_spec=pl.GridSpec(
            grid=grid,
            in_specs=[
                pl.BlockSpec((bB, tq, D), lambda b, i: (b, i, 0)),   # query tile
                pl.BlockSpec((bB, Sk, D), lambda b, i: (b, 0, 0)),   # full keys
            ],
            out_specs=(
                pl.BlockSpec((bB, tq, topk), lambda b, i: (b, i, 0)),
                pl.BlockSpec((bB, tq, topk), lambda b, i: (b, i, 0)),
            ),
        ),
        compiler_params=pltpu.CompilerParams(
            dimension_semantics=("parallel", "parallel"),
            vmem_limit_bytes=vmem_limit,
        ),
        cost_estimate=cost,
    )(query, key)

    return r_weight, topk_index


if __name__ == "__main__":
    # Small config consistent with the module: qk_dim=32, topk=4, 8 regions.
    B, S, D = 2, 8, 32
    topk = 4

    rng = jax.random.PRNGKey(0)
    kq, kk = jax.random.split(rng)
    query = jax.random.normal(kq, (B, S, D), dtype=jnp.float32)
    key = jax.random.normal(kk, (B, S, D), dtype=jnp.float32)

    r_weight, topk_index = topk_routing(query, key, topk=topk)
    r_weight = jax.block_until_ready(r_weight)
    topk_index = jax.block_until_ready(topk_index)

    # Plain-JAX reference (matches the PyTorch forward with default config).
    scale = D ** (-0.5)
    attn_logit = jnp.einsum("bqd,bkd->bqk", query * scale, key)
    ref_vals, ref_idx = jax.lax.top_k(attn_logit, topk)
    ref_w = jax.nn.softmax(ref_vals, axis=-1)

    assert r_weight.shape == (B, S, topk)
    assert topk_index.shape == (B, S, topk)
    assert jnp.allclose(r_weight, ref_w, atol=1e-5, rtol=1e-5)
    assert jnp.array_equal(topk_index, ref_idx.astype(jnp.int32))

    print("KERNEL_OK")
</pallas_src>

<mosaic_0001>
module attributes {stable_mosaic.version = 11 : i64} {
  func.func @_topk_routing_kernel(%arg0: i32, %arg1: i32, %arg2: memref<1x8x32xf32, #tpu.memory_space<vmem>>, %arg3: memref<1x8x32xf32, #tpu.memory_space<vmem>>, %arg4: memref<1x8x4xf32, #tpu.memory_space<vmem>>, %arg5: memref<1x8x4xi32, #tpu.memory_space<vmem>>) attributes {dimension_semantics = [#tpu.dimension_semantics<parallel>, #tpu.dimension_semantics<parallel>], iteration_bounds = array<i64: 2, 1>, scalar_prefetch = 0 : i64, scratch_operands = 0 : i64, tpu.core_type = #tpu.core_type<tc>, window_params = [{transform_indices = @transform_0, window_bounds = array<i64: 1, 8, 32>}, {transform_indices = @transform_1, window_bounds = array<i64: 1, 8, 32>}, {transform_indices = @transform_2, window_bounds = array<i64: 1, 8, 4>}, {transform_indices = @transform_3, window_bounds = array<i64: 1, 8, 4>}]} {
    %c0 = arith.constant 0 : index
    %c0_0 = arith.constant 0 : index
    %c0_1 = arith.constant 0 : index
    %0 = vector.load %arg2[%c0, %c0_0, %c0_1] : memref<1x8x32xf32, #tpu.memory_space<vmem>>, vector<1x8x32xf32>
    %c0_2 = arith.constant 0 : index
    %c0_3 = arith.constant 0 : index
    %c0_4 = arith.constant 0 : index
    %1 = vector.load %arg3[%c0_2, %c0_3, %c0_4] : memref<1x8x32xf32, #tpu.memory_space<vmem>>, vector<1x8x32xf32>
    "tpu.trace_start"() <{level = 10 : i32, message = "bqd,bkd->bqk"}> : () -> ()
    %cst = arith.constant dense<0.000000e+00> : vector<1x8x8xf32>
    %2 = tpu.matmul %0, %1, %cst {dimension_numbers = #tpu.dot_dimension_numbers<[2], [2], [1], [1], [0, 0, 0, 1, 1, 1], [0], [0]>} : vector<1x8x32xf32>, vector<1x8x32xf32>, vector<1x8x8xf32> -> vector<1x8x8xf32>
    "tpu.trace_stop"() : () -> ()
    %3 = tpu.iota {dimensions = array<i32: 2>} : vector<1x8x8xi32>
    %cst_5 = arith.constant dense<0xFF800000> : vector<1x8xf32>
    %4 = vector.multi_reduction <maximumf>, %2, %cst_5 [2] : vector<1x8x8xf32> to vector<1x8xf32>
    %5 = vector.shape_cast %4 : vector<1x8xf32> to vector<1x8x1xf32>
    %6 = vector.broadcast %5 : vector<1x8x1xf32> to vector<1x8x8xf32>
    %7 = arith.cmpf oeq, %2, %6 : vector<1x8x8xf32>
    %c8_i32 = arith.constant 8 : i32
    %8 = vector.broadcast %c8_i32 : i32 to vector<1x8x8xi32>
    %9 = arith.select %7, %3, %8 : vector<1x8x8xi1>, vector<1x8x8xi32>
    %cst_6 = arith.constant dense<2147483647> : vector<1x8xi32>
    %10 = vector.multi_reduction <minsi>, %9, %cst_6 [2] : vector<1x8x8xi32> to vector<1x8xi32>
    %11 = vector.shape_cast %10 : vector<1x8xi32> to vector<1x8x1xi32>
    %12 = vector.broadcast %11 : vector<1x8x1xi32> to vector<1x8x8xi32>
    %13 = arith.cmpi eq, %3, %12 : vector<1x8x8xi32>
    %cst_7 = arith.constant 0xFF800000 : f32
    %14 = vector.broadcast %cst_7 : f32 to vector<1x8x8xf32>
    %15 = arith.select %13, %14, %2 : vector<1x8x8xi1>, vector<1x8x8xf32>
    %cst_8 = arith.constant dense<0xFF800000> : vector<1x8xf32>
    %16 = vector.multi_reduction <maximumf>, %15, %cst_8 [2] : vector<1x8x8xf32> to vector<1x8xf32>
    %17 = vector.shape_cast %16 : vector<1x8xf32> to vector<1x8x1xf32>
    %18 = vector.broadcast %17 : vector<1x8x1xf32> to vector<1x8x8xf32>
    %19 = arith.cmpf oeq, %15, %18 : vector<1x8x8xf32>
    %c8_i32_9 = arith.constant 8 : i32
    %20 = vector.broadcast %c8_i32_9 : i32 to vector<1x8x8xi32>
    %21 = arith.select %19, %3, %20 : vector<1x8x8xi1>, vector<1x8x8xi32>
    %cst_10 = arith.constant dense<2147483647> : vector<1x8xi32>
    %22 = vector.multi_reduction <minsi>, %21, %cst_10 [2] : vector<1x8x8xi32> to vector<1x8xi32>
    %23 = vector.shape_cast %22 : vector<1x8xi32> to vector<1x8x1xi32>
    %24 = vector.broadcast %23 : vector<1x8x1xi32> to vector<1x8x8xi32>
    %25 = arith.cmpi eq, %3, %24 : vector<1x8x8xi32>
    %cst_11 = arith.constant 0xFF800000 : f32
    %26 = vector.broadcast %cst_11 : f32 to vector<1x8x8xf32>
    %27 = arith.select %25, %26, %15 : vector<1x8x8xi1>, vector<1x8x8xf32>
    %cst_12 = arith.constant dense<0xFF800000> : vector<1x8xf32>
    %28 = vector.multi_reduction <maximumf>, %27, %cst_12 [2] : vector<1x8x8xf32> to vector<1x8xf32>
    %29 = vector.shape_cast %28 : vector<1x8xf32> to vector<1x8x1xf32>
    %30 = vector.broadcast %29 : vector<1x8x1xf32> to vector<1x8x8xf32>
    %31 = arith.cmpf oeq, %27, %30 : vector<1x8x8xf32>
    %c8_i32_13 = arith.constant 8 : i32
    %32 = vector.broadcast %c8_i32_13 : i32 to vector<1x8x8xi32>
    %33 = arith.select %31, %3, %32 : vector<1x8x8xi1>, vector<1x8x8xi32>
    %cst_14 = arith.constant dense<2147483647> : vector<1x8xi32>
    %34 = vector.multi_reduction <minsi>, %33, %cst_14 [2] : vector<1x8x8xi32> to vector<1x8xi32>
    %35 = vector.shape_cast %34 : vector<1x8xi32> to vector<1x8x1xi32>
    %36 = vector.broadcast %35 : vector<1x8x1xi32> to vector<1x8x8xi32>
    %37 = arith.cmpi eq, %3, %36 : vector<1x8x8xi32>
    %cst_15 = arith.constant 0xFF800000 : f32
    %38 = vector.broadcast %cst_15 : f32 to vector<1x8x8xf32>
    %39 = arith.select %37, %38, %27 : vector<1x8x8xi1>, vector<1x8x8xf32>
    %cst_16 = arith.constant dense<0xFF800000> : vector<1x8xf32>
    %40 = vector.multi_reduction <maximumf>, %39, %cst_16 [2] : vector<1x8x8xf32> to vector<1x8xf32>
    %41 = vector.shape_cast %40 : vector<1x8xf32> to vector<1x8x1xf32>
    %42 = vector.broadcast %41 : vector<1x8x1xf32> to vector<1x8x8xf32>
    %43 = arith.cmpf oeq, %39, %42 : vector<1x8x8xf32>
    %c8_i32_17 = arith.constant 8 : i32
    %44 = vector.broadcast %c8_i32_17 : i32 to vector<1x8x8xi32>
    %45 = arith.select %43, %3, %44 : vector<1x8x8xi1>, vector<1x8x8xi32>
    %cst_18 = arith.constant dense<2147483647> : vector<1x8xi32>
    %46 = vector.multi_reduction <minsi>, %45, %cst_18 [2] : vector<1x8x8xi32> to vector<1x8xi32>
    %47 = vector.shape_cast %46 : vector<1x8xi32> to vector<1x8x1xi32>
    %48 = tpu.concatenate %5, %17, %29, %41 in 2 : vector<1x8x1xf32>, vector<1x8x1xf32>, vector<1x8x1xf32>, vector<1x8x1xf32> -> vector<1x8x4xf32>
    %49 = tpu.concatenate %11, %23, %35, %47 in 2 : vector<1x8x1xi32>, vector<1x8x1xi32>, vector<1x8x1xi32>, vector<1x8x1xi32> -> vector<1x8x4xi32>
    %50 = vector.broadcast %5 : vector<1x8x1xf32> to vector<1x8x4xf32>
    %51 = arith.subf %48, %50 : vector<1x8x4xf32>
    %cst_19 = arith.constant 0.176776692 : f32
    %52 = vector.broadcast %cst_19 : f32 to vector<1x8x4xf32>
    %53 = arith.mulf %51, %52 : vector<1x8x4xf32>
    %54 = math.exp %53 : vector<1x8x4xf32>
    %cst_20 = arith.constant dense<0.000000e+00> : vector<1x8xf32>
    %55 = vector.multi_reduction <add>, %54, %cst_20 [2] : vector<1x8x4xf32> to vector<1x8xf32>
    %56 = vector.shape_cast %55 : vector<1x8xf32> to vector<1x8x1xf32>
    %57 = vector.broadcast %56 : vector<1x8x1xf32> to vector<1x8x4xf32>
    %58 = arith.divf %54, %57 : vector<1x8x4xf32>
    %c0_21 = arith.constant 0 : index
    %c0_22 = arith.constant 0 : index
    %c0_23 = arith.constant 0 : index
    %59 = vector.load %arg4[%c0_21, %c0_22, %c0_23] : memref<1x8x4xf32, #tpu.memory_space<vmem>>, vector<1x8x4xf32>
    tpu.vector_store %arg4[%c0_21, %c0_22, %c0_23], %58 {strides = array<i32>} : memref<1x8x4xf32, #tpu.memory_space<vmem>>, vector<1x8x4xf32>,
    %c0_24 = arith.constant 0 : index
    %c0_25 = arith.constant 0 : index
    %c0_26 = arith.constant 0 : index
    %60 = vector.load %arg5[%c0_24, %c0_25, %c0_26] : memref<1x8x4xi32, #tpu.memory_space<vmem>>, vector<1x8x4xi32>
    tpu.vector_store %arg5[%c0_24, %c0_25, %c0_26], %49 {strides = array<i32>} : memref<1x8x4xi32, #tpu.memory_space<vmem>>, vector<1x8x4xi32>,
    return
  }
  func.func @transform_0(%arg0: i32, %arg1: i32) -> (i32, i32, i32) {
    %c0_i32 = arith.constant 0 : i32
    %c0_i32_0 = arith.constant 0 : i32
    return %arg0, %arg1, %c0_i32 : i32, i32, i32
  }
  func.func @transform_1(%arg0: i32, %arg1: i32) -> (i32, i32, i32) {
    %c0_i32 = arith.constant 0 : i32
    %c0_i32_0 = arith.constant 0 : i32
    %c0_i32_1 = arith.constant 0 : i32
    return %arg0, %c0_i32, %c0_i32_0 : i32, i32, i32
  }
  func.func @transform_2(%arg0: i32, %arg1: i32) -> (i32, i32, i32) {
    %c0_i32 = arith.constant 0 : i32
    %c0_i32_0 = arith.constant 0 : i32
    return %arg0, %arg1, %c0_i32 : i32, i32, i32
  }
  func.func @transform_3(%arg0: i32, %arg1: i32) -> (i32, i32, i32) {
    %c0_i32 = arith.constant 0 : i32
    %c0_i32_0 = arith.constant 0 : i32
    return %arg0, %arg1, %c0_i32 : i32, i32, i32
  }
}

</mosaic_0001>

<llo_original>
// kernel: topk_routing.1
$region0: #{topk_routing.1}
  #allocation0 [shape = 'u32[]', space=smem, size = 0x4, offset = 0x4, fixed_abs, tag = 'smem constant byte address 0x4 - core index']
  #allocation1 [shape = 'u32[144,128]{1,0:T(1,128)}', space=vmem, size = 0x12000, scoped, tag = 'internal scratch']
  %s0 = inlined_call_operand.hbm [shape: f32[2,8,32], index: 0, kind: input, shape index: {}]
  %s1 = inlined_call_operand.hbm [shape: f32[2,8,32], index: 1, kind: input, shape index: {}]
  %s2 = inlined_call_operand.hbm [shape: f32[2,8,4], index: 2, kind: output, shape index: {0}]
  %s3 = inlined_call_operand.hbm [shape: s32[2,8,4], index: 3, kind: output, shape index: {1}]
  %4 = xla_tuple %s2, %s3
  %s5 = sld [smem:[#allocation0]]
  $region57: #{topk_routing.1} parent=0
    _
  %s7 = ssub.s32 1, %s5
  %s8 = scalar_select 0, %s7, %s5
  $region1: #{topk_routing.1} parent=0
    #allocation2 [shape = 'u8[8192]{0}', space=vmem, size = 0x2000, scoped, tag = 'input window, operand 0']
    #allocation3 [shape = 's32[2]{0}', space=sflag, size = 0x8, scoped, tag = 'scoped memory for topk_routing.1']
    #allocation4 [shape = 's32[2]{0}', space=sflag, size = 0x8, scoped, tag = 'scoped memory for topk_routing.1']
    #allocation5 [shape = 'u8[8192]{0}', space=vmem, size = 0x2000, scoped, tag = 'input window, operand 1']
    #allocation6 [shape = 's32[2]{0}', space=sflag, size = 0x8, scoped, tag = 'scoped memory for topk_routing.1']
    #allocation7 [shape = 'u8[8192]{0}', space=vmem, size = 0x2000, scoped, tag = 'output window, operand 0']
    #allocation8 [shape = 'u8[8192]{0}', space=vmem, size = 0x2000, scoped, tag = 'output window, operand 1']
    #allocation9 [shape = 's32[2]{0}', space=sflag, size = 0x8, scoped, tag = 'scoped memory for topk_routing.1']
    %9 = vsyncpa [#allocation3], 0
    %s10 = scalar_lea.sflag [#allocation3], 1
    %11 = vsyncpa %s10, 0
    %12 = vsyncpa [#allocation6], 0
    %s13 = scalar_lea.sflag [#allocation6], 1
    %14 = vsyncpa %s13, 0
    %15 = vsyncpa [#allocation4], 0
    %s16 = scalar_lea.sflag [#allocation4], 1
    %17 = vsyncpa %s16, 0
    %18 = vsyncpa [#allocation9], 0
    %s19 = scalar_lea.sflag [#allocation9], 1
    %20 = vsyncpa %s19, 0
    loop: start=0, step=1, limit=4
    $region2: #{topk_routing.1} parent=1 // loop_pre_header
      _
    $region3: #{topk_routing.1} parent=1 // loop_header
      %s22 = sphi 0, %s26
      %p23 = scmp.ge.s32.totalorder %s22, 4
      %s29 = sphi 0, %s41
      %s30 = sphi 0, %s37
      %s31 = sphi 0, %s29
      %s32 = sphi 0, %s30
      %s33 = sphi 0, %s31
      %s34 = sphi 0, %s32
      %s46 = sphi 0, %s48
      %s49 = sphi 0, %s46
      %s50 = sphi 0, %s49
      %s66 = sphi 0, %s50
      %s72 = sphi 0, %s74
      %s75 = sphi 0, %s72
      %s76 = sphi 0, %s75
      %s92 = sphi 0, %s76
      %s100 = sphi 0, %s102
      %s103 = sphi 0, %s100
      %s104 = sphi 0, %s103
      %s120 = sphi 0, %s104
      %s128 = sphi 0, %s130
      %s131 = sphi 0, %s128
      %s132 = sphi 0, %s131
      %s148 = sphi 0, %s132
    $region4: #{topk_routing.1} parent=1 // loop_header_branch
      %25 = sbr.rel (%p23) target = $region8
    $region5: #{topk_routing.1} parent=1 // loop_body
      %s27 = ssub.s32 %s22, 1
      %s28 = ssub.s32 %s22, 2
      %s35 = sadd.s32 1, %s30
      %p36 = scmp.ge.s32.totalorder %s35, 1
      %s37 = scalar_select %p36, 0, %s35
      %s38 = sadd.s32 1, %s29
      %s39 = scalar_select %p36, %s38, %s29
      %p40 = scmp.ge.s32.totalorder %s39, 2
      %s41 = scalar_select %p40, 0, %s39
      %s42 = ssub.s32 %s29, %s41
      %s43 = ssub.s32 %s30, %s37
      %s44 = sor.u32 %s42, %s43
      %p45 = scmp.eq.s32.totalorder %s44, 0
      %s47 = sadd.s32 %s46, 1
      %s48 = scalar_select %p45, %s46, %s47
      %p51 = pneg %p45
      %p52 = scmp.eq.s32.totalorder %s22, 1
      %p53 = por %p51, %p52
      %p54 = scmp.ne.s32.totalorder %s46, %s49
      %p55 = scmp.eq.s32.totalorder %s22, 0
      %p56 = por %p54, %p55
      %p57 = scmp.ne.s32.totalorder %s46, %s49
      %p58 = scmp.eq.s32.totalorder %s27, 1
      %p59 = por %p57, %p58
      %p60 = scmp.ne.s32.totalorder %s49, %s50
      %p61 = scmp.eq.s32.totalorder %s27, 0
      %p62 = por %p60, %p61
      %p63 = scmp.ne.s32.totalorder %s49, %s50
      %p64 = scmp.eq.s32.totalorder %s28, 1
      %p65 = por %p63, %p64
      %p67 = scmp.ne.s32.totalorder %s50, %s66
      %p68 = scmp.eq.s32.totalorder %s28, 0
      %p69 = por %p67, %p68
      %s70 = ssub.s32 %s29, %s41
      %p71 = scmp.eq.s32.totalorder %s70, 0
      %s73 = sadd.s32 %s72, 1
      %s74 = scalar_select %p71, %s72, %s73
      %p77 = pneg %p71
      %p78 = scmp.eq.s32.totalorder %s22, 1
      %p79 = por %p77, %p78
      %p80 = scmp.ne.s32.totalorder %s72, %s75
      %p81 = scmp.eq.s32.totalorder %s22, 0
      %p82 = por %p80, %p81
      %p83 = scmp.ne.s32.totalorder %s72, %s75
      %p84 = scmp.eq.s32.totalorder %s27, 1
      %p85 = por %p83, %p84
      %p86 = scmp.ne.s32.totalorder %s75, %s76
      %p87 = scmp.eq.s32.totalorder %s27, 0
      %p88 = por %p86, %p87
      %p89 = scmp.ne.s32.totalorder %s75, %s76
      %p90 = scmp.eq.s32.totalorder %s28, 1
      %p91 = por %p89, %p90
      %p93 = scmp.ne.s32.totalorder %s76, %s92
      %p94 = scmp.eq.s32.totalorder %s28, 0
      %p95 = por %p93, %p94
      %s96 = ssub.s32 %s29, %s41
      %s97 = ssub.s32 %s30, %s37
      %s98 = sor.u32 %s96, %s97
      %p99 = scmp.eq.s32.totalorder %s98, 0
      %s101 = sadd.s32 %s100, 1
      %s102 = scalar_select %p99, %s100, %s101
      %p105 = pneg %p99
      %p106 = scmp.eq.s32.totalorder %s22, 1
      %p107 = por %p105, %p106
      %p108 = scmp.ne.s32.totalorder %s100, %s103
      %p109 = scmp.eq.s32.totalorder %s22, 0
      %p110 = por %p108, %p109
      %p111 = scmp.ne.s32.totalorder %s100, %s103
      %p112 = scmp.eq.s32.totalorder %s27, 1
      %p113 = por %p111, %p112
      %p114 = scmp.ne.s32.totalorder %s103, %s104
      %p115 = scmp.eq.s32.totalorder %s27, 0
      %p116 = por %p114, %p115
      %p117 = scmp.ne.s32.totalorder %s103, %s104
      %p118 = scmp.eq.s32.totalorder %s28, 1
      %p119 = por %p117, %p118
      %p121 = scmp.ne.s32.totalorder %s104, %s120
      %p122 = scmp.eq.s32.totalorder %s28, 0
      %p123 = por %p121, %p122
      %s124 = ssub.s32 %s29, %s41
      %s125 = ssub.s32 %s30, %s37
      %s126 = sor.u32 %s124, %s125
      %p127 = scmp.eq.s32.totalorder %s126, 0
      %s129 = sadd.s32 %s128, 1
      %s130 = scalar_select %p127, %s128, %s129
      %p133 = pneg %p127
      %p134 = scmp.eq.s32.totalorder %s22, 1
      %p135 = por %p133, %p134
      %p136 = scmp.ne.s32.totalorder %s128, %s131
      %p137 = scmp.eq.s32.totalorder %s22, 0
      %p138 = por %p136, %p137
      %p139 = scmp.ne.s32.totalorder %s128, %s131
      %p140 = scmp.eq.s32.totalorder %s27, 1
      %p141 = por %p139, %p140
      %p142 = scmp.ne.s32.totalorder %s131, %s132
      %p143 = scmp.eq.s32.totalorder %s27, 0
      %p144 = por %p142, %p143
      %p145 = scmp.ne.s32.totalorder %s131, %s132
      %p146 = scmp.eq.s32.totalorder %s28, 1
      %p147 = por %p145, %p146
      %p149 = scmp.ne.s32.totalorder %s132, %s148
      %p150 = scmp.eq.s32.totalorder %s28, 0
      %p151 = por %p149, %p150
      %p152 = scmp.le.s32.totalorder 1, %s22
      %p153 = scmp.lt.s32.totalorder %s22, 3
      %p154 = pnand %p152, %p153
      %p155 = pneg %p154
      // Predicated region
      $region9: #{topk_routing.1} parent=5 // pred_check
        _
      $region10: #{topk_routing.1} parent=5 // pred_check_branch
        %157 = sbr.rel (%p154) target = $region12
      $region11: #{topk_routing.1} parent=5 // pred_region
        %s158 = ssub.s32 %s22, 1
      $region12: #{topk_routing.1} parent=5 // pred_fallthru
        _
      %p159 = scmp.lt.s32.totalorder %s22, 2
      // Predicated region
      $region13: #{topk_routing.1} parent=5 // pred_check
        %p160 = pneg %p159
      $region14: #{topk_routing.1} parent=5 // pred_check_branch
        %162 = sbr.rel (%p160) target = $region16
      $region15: #{topk_routing.1} parent=5 // pred_region
        // Predicated region
        $region17: #{topk_routing.1} parent=15 // pred_check
          %p163 = pneg %p56
        $region18: #{topk_routing.1} parent=15 // pred_check_branch
          %165 = sbr.rel (%p163) target = $region20
        $region19: #{topk_routing.1} parent=15 // pred_region
          %s166 = sand.u32 %s46, 1
          %s167 = scalar_lea.sflag [#allocation3], %s166
          %s168 = sand.u32 %s46, 1
          %s169 = smul.addr %s168, 8
          %s170 = scalar_lea.vmem [#allocation2], %s169
          %s172 = ssub.s32 128, 128
          %173 = vsyncadd %s167, %s172
          %s174 = sadd.s32 %s30, %s29
          %s175 = smul.addr %s174, 128
          %s176 = scalar_lea.hbm %s0, %s175
          %s178 = sshll.u32 %s170, 4
          %s179 = int_to_ptr.vmem [resolvable:$true] %s178
          %181 = dma.hbm_to_vmem [thread:$0]  %s176, 128, %s179, %s167
        $region20: #{topk_routing.1} parent=15 // pred_fallthru
          _
        // Predicated region
        $region21: #{topk_routing.1} parent=15 // pred_check
          %p182 = pneg %p82
        $region22: #{topk_routing.1} parent=15 // pred_check_branch
          %184 = sbr.rel (%p182) target = $region24
        $region23: #{topk_routing.1} parent=15 // pred_region
          %s185 = sand.u32 %s72, 1
          %s186 = scalar_lea.sflag [#allocation6], %s185
          %s187 = sand.u32 %s72, 1
          %s188 = smul.addr %s187, 8
          %s189 = scalar_lea.vmem [#allocation5], %s188
          %s191 = ssub.s32 128, 128
          %192 = vsyncadd %s186, %s191
          %s193 = smul.addr %s29, 128
          %s194 = scalar_lea.hbm %s1, %s193
          %s196 = sshll.u32 %s189, 4
          %s197 = int_to_ptr.vmem [resolvable:$true] %s196
          %199 = dma.hbm_to_vmem [thread:$0]  %s194, 128, %s197, %s186
        $region24: #{topk_routing.1} parent=15 // pred_fallthru
          _
      $region16: #{topk_routing.1} parent=5 // pred_fallthru
        _
      %p200 = scmp.le.s32.totalorder 1, %s22
      %p201 = scmp.lt.s32.totalorder %s22, 3
      %p202 = pnand %p200, %p201
      %p203 = pneg %p202
      // Predicated region
      $region25: #{topk_routing.1} parent=5 // pred_check
        _
      $region26: #{topk_routing.1} parent=5 // pred_check_branch
        %205 = sbr.rel (%p202) target = $region28
      $region27: #{topk_routing.1} parent=5 // pred_region
        %s206 = ssub.s32 %s22, 1
        %s207 = sand.u32 %s49, 1
        %s208 = scalar_lea.sflag [#allocation3], %s207
        %s209 = sand.u32 %s49, 1
        %s210 = smul.addr %s209, 8
        %s211 = scalar_lea.vmem [#allocation2], %s210
        // Predicated region
        $region29: #{topk_routing.1} parent=27 // pred_check
          %p212 = pneg %p62
        $region30: #{topk_routing.1} parent=27 // pred_check_branch
          %214 = sbr.rel (%p212) target = $region32
        $region31: #{topk_routing.1} parent=27 // pred_region
          %215 = dma.done %s208, 128
        $region32: #{topk_routing.1} parent=27 // pred_fallthru
          _
        %s216 = sand.u32 %s75, 1
        %s217 = scalar_lea.sflag [#allocation6], %s216
        %s218 = sand.u32 %s75, 1
        %s219 = smul.addr %s218, 8
        %s220 = scalar_lea.vmem [#allocation5], %s219
        // Predicated region
        $region33: #{topk_routing.1} parent=27 // pred_check
          %p221 = pneg %p88
        $region34: #{topk_routing.1} parent=27 // pred_check_branch
          %223 = sbr.rel (%p221) target = $region36
        $region35: #{topk_routing.1} parent=27 // pred_region
          %224 = dma.done %s217, 128
        $region36: #{topk_routing.1} parent=27 // pred_fallthru
          _
        %s225 = sand.u32 %s49, 1
        %s226 = scalar_lea.sflag [#allocation3], %s225
        %s227 = sand.u32 %s49, 1
        %s228 = smul.addr %s227, 8
        %s229 = scalar_lea.vmem [#allocation2], %s228
        %p230 = pneg %p62
        %p231 = pneg %p59
        %s232 = sand.u32 %s75, 1
        %s233 = scalar_lea.sflag [#allocation6], %s232
        %s234 = sand.u32 %s75, 1
        %s235 = smul.addr %s234, 8
        %s236 = scalar_lea.vmem [#allocation5], %s235
        %p237 = pneg %p88
        %p238 = pneg %p85
        %p239 = pneg %p116
        %p240 = pneg %p113
        %s241 = sand.u32 %s103, 1
        %s242 = scalar_lea.sflag [#allocation4], %s241
        %s243 = sand.u32 %s103, 1
        %s244 = smul.addr %s243, 8
        %s245 = scalar_lea.vmem [#allocation7], %s244
        %p246 = pneg %p144
        %p247 = pneg %p141
        %s248 = sand.u32 %s131, 1
        %s249 = scalar_lea.sflag [#allocation9], %s248
        %s250 = sand.u32 %s131, 1
        %s251 = smul.addr %s250, 8
        %s252 = scalar_lea.vmem [#allocation8], %s251
        %v253 = vld [vmem:[%s211] sm:$0xff]
        %v254 = vld [vmem:[%s220] sm:$0xff]
        %vm255 = vcmask 261120
        %v257 = vsel %vm255, %v253, 0
        %v260 = vsel %vm255, %v254, 0
        %262 = vmatprep.subr.mxu0 0.0
        %263 = vmatpush1.xpose.msra.mxu0 %v260
        %264 = vmatprep.subr.mxu0 0.0
        %265 = vmatpush1.xpose.msra.mxu0 0.0
        %266 = vmatprep.subr.mxu0 0.0
        %267 = vmatpush1.xpose.msra.mxu0 0.0
        %268 = vmatprep.subr.mxu0 0.0
        %269 = vmatpush1.xpose.msra.mxu0 0.0
        %270 = vmatprep.subr.mxu0 0.0
        %271 = vmatpush1.xpose.msra.mxu0 0.0
        %272 = vmatprep.subr.mxu0 0.0
        %273 = vmatpush1.xpose.msra.mxu0 0.0
        %274 = vmatprep.subr.mxu0 0.0
        %275 = vmatpush1.xpose.msra.mxu0 0.0
        %276 = vmatprep.subr.mxu0 0.0
        %277 = vmatpush1.xpose.msra.mxu0 0.0
        %278 = vmatprep.subr.mxu0 0.0
        %279 = vmatpush1.xpose.msra.mxu0 0.0
        %280 = vmatprep.subr.mxu0 0.0
        %281 = vmatpush1.xpose.msra.mxu0 0.0
        %282 = vmatprep.subr.mxu0 0.0
        %283 = vmatpush1.xpose.msra.mxu0 0.0
        %284 = vmatprep.subr.mxu0 0.0
        %285 = vmatpush1.xpose.msra.mxu0 0.0
        %286 = vmatprep.subr.mxu0 0.0
        %287 = vmatpush1.xpose.msra.mxu0 0.0
        %288 = vmatprep.subr.mxu0 0.0
        %289 = vmatpush1.xpose.msra.mxu0 0.0
        %290 = vmatprep.subr.mxu0 0.0
        %291 = vmatpush1.xpose.msra.mxu0 0.0
        %292 = vmatprep.subr.mxu0 0.0
        %293 = vmatpush1.xpose.msra.mxu0 0.0
        %294 = vmatprep.subr.mxu0 0.0
        %295 = vmatpush1.xpose.msra.mxu0 0.0
        %296 = vmatprep.subr.mxu0 0.0
        %297 = vmatpush1.xpose.msra.mxu0 0.0
        %298 = vmatprep.subr.mxu0 0.0
        %299 = vmatpush1.xpose.msra.mxu0 0.0
        %300 = vmatprep.subr.mxu0 0.0
        %301 = vmatpush1.xpose.msra.mxu0 0.0
        %302 = vmatprep.subr.mxu0 0.0
        %303 = vmatpush1.xpose.msra.mxu0 0.0
        %304 = vmatprep.subr.mxu0 0.0
        %305 = vmatpush1.xpose.msra.mxu0 0.0
        %306 = vmatprep.subr.mxu0 0.0
        %307 = vmatpush1.xpose.msra.mxu0 0.0
        %308 = vmatprep.subr.mxu0 0.0
        %309 = vmatpush1.xpose.msra.mxu0 0.0
        %310 = vmatprep.subr.mxu0 0.0
        %311 = vmatpush1.xpose.msra.mxu0 0.0
        %312 = vmatprep.subr.mxu0 0.0
        %313 = vmatpush1.xpose.msra.mxu0 0.0
        %314 = vmatprep.subr.mxu0 0.0
        %315 = vmatpush1.xpose.msra.mxu0 0.0
        %316 = vmatprep.subr.mxu0 0.0
        %317 = vmatpush1.xpose.msra.mxu0 0.0
        %318 = vmatprep.subr.mxu0 0.0
        %319 = vmatpush1.xpose.msra.mxu0 0.0
        %320 = vmatprep.subr.mxu0 0.0
        %321 = vmatpush1.xpose.msra.mxu0 0.0
        %322 = vmatprep.subr.mxu0 0.0
        %323 = vmatpush1.xpose.msra.mxu0 0.0
        %324 = vmatprep.subr.mxu0 0.0
        %325 = vmatpush1.xpose.msra.mxu0 0.0
        %326 = vmatprep.mubr.f32.mxu0 0.0
        %327 = vmatmul.mubr.f32.gmra.mrb[0].mxu0 %v257
        %v328 = vpop.f32.mrb[0].mxu0
        %v329 = vadd.f32 0.0, %v328
        %v330 = vpop.f32.mrb[0].mxu0
        %331 = vdwg.mxu0
        %v332 = vlaneseq
        %v333 = vand.u32 %v332, 127
        %vm334 = vcmask 64512
        %v335 = vsel %vm334, %v329, -inf
        %336 = vmax.xlane.f32.xlu0 %v335
        %v337 = vpop.xlane.xlu0 %336
        %vm338 = vcmp.eq.f32.partialorder %v329, %v337
        %v339 = vsel %vm338, %v333, 8
        %v340 = vsel %vm334, %v339, 2147483647
        %v341 = vand.u32 %v340, 65535
        %v342 = vshra.s32 %v340, 16
        %v343 = vcvt.s32.f32 %v341
        %v344 = vcvt.s32.f32 %v342
        %345 = vmin.xlane.f32.xlu0 %v344
        %v346 = vpop.xlane.xlu0 %345
        %vm347 = vcmp.eq.f32.partialorder %v344, %v346
        %v348 = vsel %vm347, %v343, inf
        %349 = vmin.xlane.f32.xlu0 %v348
        %v350 = vpop.xlane.xlu0 %349
        %v351 = vcvt.f32.s32 %v350
        %v352 = vcvt.f32.s32 %v346
        %v353 = vshll.u32 %v352, 16
        %v354 = vadd.s32 %v353, %v351
        %vm355 = vcmp.eq.s32.totalorder %v333, %v354
        %v356 = vsel %vm355, -inf, %v329
        %v357 = vsel %vm334, %v356, -inf
        %358 = vmax.xlane.f32.xlu0 %v357
        %v359 = vpop.xlane.xlu0 %358
        %vm360 = vcmp.eq.f32.partialorder %v356, %v359
        %v361 = vsel %vm360, %v333, 8
        %v362 = vsel %vm334, %v361, 2147483647
        %v363 = vand.u32 %v362, 65535
        %v364 = vshra.s32 %v362, 16
        %v365 = vcvt.s32.f32 %v363
        %v366 = vcvt.s32.f32 %v364
        %367 = vmin.xlane.f32.xlu0 %v366
        %v368 = vpop.xlane.xlu0 %367
        %vm369 = vcmp.eq.f32.partialorder %v366, %v368
        %v370 = vsel %vm369, %v365, inf
        %371 = vmin.xlane.f32.xlu0 %v370
        %v372 = vpop.xlane.xlu0 %371
        %v373 = vcvt.f32.s32 %v372
        %v374 = vcvt.f32.s32 %v368
        %v375 = vshll.u32 %v374, 16
        %v376 = vadd.s32 %v375, %v373
        %vm377 = vcmp.eq.s32.totalorder %v333, %v376
        %v378 = vsel %vm377, -inf, %v356
        %v379 = vsel %vm334, %v378, -inf
        %380 = vmax.xlane.f32.xlu0 %v379
        %v381 = vpop.xlane.xlu0 %380
        %vm382 = vcmp.eq.f32.partialorder %v378, %v381
        %v383 = vsel %vm382, %v333, 8
        %v384 = vsel %vm334, %v383, 2147483647
        %v385 = vand.u32 %v384, 65535
        %v386 = vshra.s32 %v384, 16
        %v387 = vcvt.s32.f32 %v385
        %v388 = vcvt.s32.f32 %v386
        %389 = vmin.xlane.f32.xlu0 %v388
        %v390 = vpop.xlane.xlu0 %389
        %vm391 = vcmp.eq.f32.partialorder %v388, %v390
        %v392 = vsel %vm391, %v387, inf
        %393 = vmin.xlane.f32.xlu0 %v392
        %v394 = vpop.xlane.xlu0 %393
        %v395 = vcvt.f32.s32 %v394
        %v396 = vcvt.f32.s32 %v390
        %v397 = vshll.u32 %v396, 16
        %v398 = vadd.s32 %v397, %v395
        %vm399 = vcmp.eq.s32.totalorder %v333, %v398
        %v400 = vsel %vm399, -inf, %v378
        %v401 = vsel %vm334, %v400, -inf
        %402 = vmax.xlane.f32.xlu0 %v401
        %v403 = vpop.xlane.xlu0 %402
        %vm404 = vcmp.eq.f32.partialorder %v400, %v403
        %v405 = vsel %vm404, %v333, 8
        %v406 = vsel %vm334, %v405, 2147483647
        %v407 = vand.u32 %v406, 65535
        %v408 = vshra.s32 %v406, 16
        %v409 = vcvt.s32.f32 %v407
        %v410 = vcvt.s32.f32 %v408
        %411 = vmin.xlane.f32.xlu0 %v410
        %v412 = vpop.xlane.xlu0 %411
        %vm413 = vcmp.eq.f32.partialorder %v410, %v412
        %v414 = vsel %vm413, %v409, inf
        %415 = vmin.xlane.f32.xlu0 %v414
        %v416 = vpop.xlane.xlu0 %415
        %v417 = vcvt.f32.s32 %v416
        %v418 = vcvt.f32.s32 %v412
        %v419 = vshll.u32 %v418, 16
        %v420 = vadd.s32 %v419, %v417
        %vm421 = vcmask 7168
        %v422 = vsel %vm421, %v337, %v359
        %vm423 = vcmask 15360
        %v424 = vsel %vm423, %v422, %v381
        %vm425 = vcmask 23552
        %v426 = vsel %vm425, %v424, %v403
        %v427 = vsel %vm421, %v354, %v376
        %v428 = vsel %vm423, %v427, %v398
        %v429 = vsel %vm425, %v428, %v420
        %v430 = vsub.f32 %v426, %v337
        %v431 = vmul.f32 %v430, 0.17677669
        %v432 = vmul.f32 %v431, 1.442695
        %v433 = vpow.pop %v432
        %vm434 = vcmask 31744
        %v435 = vsel %vm434, %v433, 0.0
        %436 = vadd.xlane.f32.xlu0 %v435
        %v437 = vpop.xlane.xlu0 %436
        %v438 = vrcp.pop %v437
        %v439 = vmul.f32 %v433, %v438
        %440 = vst.msk [vmem:[%s245] sm:$0xff] %vm434, %v439
        %441 = vst.msk [vmem:[%s252] sm:$0xff] %vm434, %v429
        %s442 = sand.u32 %s103, 1
        %s443 = scalar_lea.sflag [#allocation4], %s442
        %s444 = sand.u32 %s103, 1
        %s445 = smul.addr %s444, 8
        %s446 = scalar_lea.vmem [#allocation7], %s445
        %s447 = sand.u32 %s131, 1
        %s448 = scalar_lea.sflag [#allocation9], %s447
        %s449 = sand.u32 %s131, 1
        %s450 = smul.addr %s449, 8
        %s451 = scalar_lea.vmem [#allocation8], %s450
        // Predicated region
        $region37: #{topk_routing.1} parent=27 // pred_check
          %p452 = pneg %p113
        $region38: #{topk_routing.1} parent=27 // pred_check_branch
          %454 = sbr.rel (%p452) target = $region40
        $region39: #{topk_routing.1} parent=27 // pred_region
          %s456 = ssub.s32 128, 128
          %457 = vsyncadd %s443, %s456
          %s458 = sadd.s32 %s32, %s31
          %s459 = smul.addr %s458, 128
          %s460 = scalar_lea.hbm %s2, %s459
          %s462 = sshll.u32 %s446, 4
          %s463 = int_to_ptr.vmem [resolvable:$true] %s462
          %465 = dma.vmem_to_hbm [thread:$0]  %s463, 128, %s460, %s443
        $region40: #{topk_routing.1} parent=27 // pred_fallthru
          _
        // Predicated region
        $region41: #{topk_routing.1} parent=27 // pred_check
          %p466 = pneg %p141
        $region42: #{topk_routing.1} parent=27 // pred_check_branch
          %468 = sbr.rel (%p466) target = $region44
        $region43: #{topk_routing.1} parent=27 // pred_region
          %s470 = ssub.s32 128, 128
          %471 = vsyncadd %s448, %s470
          %s472 = sadd.s32 %s32, %s31
          %s473 = smul.addr %s472, 128
          %s474 = scalar_lea.hbm %s3, %s473
          %s476 = sshll.u32 %s451, 4
          %s477 = int_to_ptr.vmem [resolvable:$true] %s476
          %479 = dma.vmem_to_hbm [thread:$0]  %s477, 128, %s474, %s448
        $region44: #{topk_routing.1} parent=27 // pred_fallthru
          _
      $region28: #{topk_routing.1} parent=5 // pred_fallthru
        _
      %p480 = scmp.le.s32.totalorder 2, %s22
      // Predicated region
      $region45: #{topk_routing.1} parent=5 // pred_check
        %p481 = pneg %p480
      $region46: #{topk_routing.1} parent=5 // pred_check_branch
        %483 = sbr.rel (%p481) target = $region48
      $region47: #{topk_routing.1} parent=5 // pred_region
        %s484 = ssub.s32 %s22, 2
        // Predicated region
        $region49: #{topk_routing.1} parent=47 // pred_check
          %p485 = pneg %p119
        $region50: #{topk_routing.1} parent=47 // pred_check_branch
          %487 = sbr.rel (%p485) target = $region52
        $region51: #{topk_routing.1} parent=47 // pred_region
          %s488 = sand.u32 %s104, 1
          %s489 = scalar_lea.sflag [#allocation4], %s488
          %s490 = sand.u32 %s104, 1
          %s491 = smul.addr %s490, 8
          %s492 = scalar_lea.vmem [#allocation7], %s491
          %493 = dma.done %s489, 128
        $region52: #{topk_routing.1} parent=47 // pred_fallthru
          _
        // Predicated region
        $region53: #{topk_routing.1} parent=47 // pred_check
          %p494 = pneg %p147
        $region54: #{topk_routing.1} parent=47 // pred_check_branch
          %496 = sbr.rel (%p494) target = $region56
        $region55: #{topk_routing.1} parent=47 // pred_region
          %s497 = sand.u32 %s132, 1
          %s498 = scalar_lea.sflag [#allocation9], %s497
          %s499 = sand.u32 %s132, 1
          %s500 = smul.addr %s499, 8
          %s501 = scalar_lea.vmem [#allocation8], %s500
          %502 = dma.done %s498, 128
        $region56: #{topk_routing.1} parent=47 // pred_fallthru
          _
      $region48: #{topk_routing.1} parent=5 // pred_fallthru
        _
    $region6: #{topk_routing.1} parent=1 // loop_footer
      %s26 = sadd.s32 1, %s22
    $region7: #{topk_routing.1} parent=1 // loop_footer_branch
      %21 = sbr.rel target = $region3
    $region8: #{topk_routing.1} parent=1 // loop_exit
      _
    %503 = vsyncpa [#allocation3], 1
    %s504 = scalar_lea.sflag [#allocation3], 1
    %505 = vsyncpa %s504, 1
    %506 = vsyncpa [#allocation6], 1
    %s507 = scalar_lea.sflag [#allocation6], 1
    %508 = vsyncpa %s507, 1
    %509 = vsyncpa [#allocation4], 1
    %s510 = scalar_lea.sflag [#allocation4], 1
    %511 = vsyncpa %s510, 1
    %512 = vsyncpa [#allocation9], 1
    %s513 = scalar_lea.sflag [#allocation9], 1
    %514 = vsyncpa %s513, 1

</llo_original>
